<compile_context>
chip_gen: v6e
topology: v6e:2x2x1
jax: 0.10.0
libtpu: 0.0.40
codegen_flags: <defaults>
</compile_context>

<pallas_src>
import jax
import jax.numpy as jnp
from jax.experimental import pallas as pl
from jax.experimental.pallas import tpu as pltpu


def _round_up(x, m):
    return ((x + m - 1) // m) * m


def mlp_kernel(x_ref, w1_ref, b1_ref, w2_ref, b2_ref, o_ref):
    # Fused 2-layer MLP: matmul -> bias -> relu -> matmul -> bias.
    # Inputs x/w1/w2 are bf16; accumulation and elementwise work are f32.
    h = jnp.dot(x_ref[...], w1_ref[...],
                preferred_element_type=jnp.float32)          # (TB, Hp) f32
    h = jnp.maximum(h + b1_ref[...], 0.0)                    # bias + ReLU in f32
    # Dropout(p=0.5) -> identity (eval mode)
    o = jnp.dot(h.astype(w2_ref.dtype), w2_ref[...],
                preferred_element_type=jnp.float32)          # (TB, Lp) f32
    o_ref[...] = (o + b2_ref[...]).astype(o_ref.dtype)


def mlp_forward(x, w1, b1, w2, b2, *, block_b=512):
    """x: (B, embed_size) f32; returns (B, label_size) f32."""
    B, E = x.shape
    H = w1.shape[1]          # 64
    L = w2.shape[1]          # label_size

    # --- pad feature dims to lane-dense (multiples of 128), zero-filled ---
    H_pad = _round_up(H, 128)
    L_pad = _round_up(L, 128)

    w1_p = jnp.zeros((E, H_pad), jnp.bfloat16).at[:, :H].set(
        w1.astype(jnp.bfloat16))
    b1_p = jnp.zeros((1, H_pad), jnp.float32).at[:, :H].set(
        b1.reshape(1, H).astype(jnp.float32))
    w2_p = jnp.zeros((H_pad, L_pad), jnp.bfloat16).at[:H, :L].set(
        w2.astype(jnp.bfloat16))
    b2_p = jnp.zeros((1, L_pad), jnp.float32).at[:, :L].set(
        b2.reshape(1, L).astype(jnp.float32))

    # --- batch tiling: large tile, multiple of 16 (bf16 sublane packing) ---
    TB = min(block_b, _round_up(B, 16))
    TB = _round_up(TB, 16)
    B_pad = _round_up(B, TB)

    x_bf = x.astype(jnp.bfloat16)
    if B_pad != B:
        x_bf = jnp.pad(x_bf, ((0, B_pad - B), (0, 0)))

    grid = (B_pad // TB,)

    cost = pl.CostEstimate(
        flops=2 * B_pad * E * H_pad + 2 * B_pad * H_pad * L_pad,
        transcendentals=0,
        bytes_accessed=(2 * x_bf.size + 2 * w1_p.size + 2 * w2_p.size
                        + 4 * b1_p.size + 4 * b2_p.size
                        + 4 * B_pad * L_pad),
    )

    out = pl.pallas_call(
        mlp_kernel,
        out_shape=jax.ShapeDtypeStruct((B_pad, L_pad), jnp.float32),
        grid_spec=pl.GridSpec(
            grid=grid,
            in_specs=[
                pl.BlockSpec((TB, E), lambda i: (i, 0)),        # x: tiled over batch
                pl.BlockSpec((E, H_pad), lambda i: (0, 0)),     # w1: resident
                pl.BlockSpec((1, H_pad), lambda i: (0, 0)),     # b1: resident
                pl.BlockSpec((H_pad, L_pad), lambda i: (0, 0)),  # w2: resident
                pl.BlockSpec((1, L_pad), lambda i: (0, 0)),     # b2: resident
            ],
            out_specs=pl.BlockSpec((TB, L_pad), lambda i: (i, 0)),
        ),
        compiler_params=pltpu.CompilerParams(
            dimension_semantics=("parallel",)),
        cost_estimate=cost,
    )(x_bf, w1_p, b1_p, w2_p, b2_p)

    # Slice away batch padding and the zero-padded label lanes.
    return out[:B, :L]


def init_params(key, embed_size, label_size, hidden=64):
    """Deterministic synthetic parameters (shapes match nn.Linear, transposed)."""
    k1, k2, k3, k4 = jax.random.split(key, 4)
    w1 = jax.random.normal(k1, (embed_size, hidden), jnp.float32) * 0.05
    b1 = jax.random.normal(k2, (1, hidden), jnp.float32) * 0.01
    w2 = jax.random.normal(k3, (hidden, label_size), jnp.float32) * 0.05
    b2 = jax.random.normal(k4, (1, label_size), jnp.float32) * 0.01
    return w1, b1, w2, b2


if __name__ == "__main__":
    embed_size = 32
    label_size = 8
    batch = 200            # not a multiple of the tile -> exercises padding
    block_b = 64           # small tile for the test; defaults to 512 in prod

    key = jax.random.PRNGKey(0)
    kx, kp = jax.random.split(key)

    x = jax.random.normal(kx, (batch, embed_size), jnp.float32)
    w1, b1, w2, b2 = init_params(kp, embed_size, label_size)

    out = mlp_forward(x, w1, b1, w2, b2, block_b=block_b)
    out = jax.block_until_ready(out)

    # Reference check against plain f32 JAX (eval-mode semantics).
    ref = jnp.maximum(x @ w1 + b1, 0.0) @ w2 + b2
    assert out.shape == (batch, label_size)
    # Tolerance loosened for the bf16 input/weight cast (f32 accumulation).
    assert jnp.allclose(out, ref, atol=2e-2, rtol=2e-2), (
        float(jnp.max(jnp.abs(out - ref))))

    print("KERNEL_OK")
</pallas_src>

<mosaic_0001>
module attributes {stable_mosaic.version = 11 : i64} {
  func.func @mlp_kernel(%arg0: i32, %arg1: memref<64x32xbf16, #tpu.memory_space<vmem>>, %arg2: memref<32x128xbf16, #tpu.memory_space<vmem>>, %arg3: memref<1x128xf32, #tpu.memory_space<vmem>>, %arg4: memref<128x128xbf16, #tpu.memory_space<vmem>>, %arg5: memref<1x128xf32, #tpu.memory_space<vmem>>, %arg6: memref<64x128xf32, #tpu.memory_space<vmem>>) attributes {dimension_semantics = [#tpu.dimension_semantics<parallel>], iteration_bounds = array<i64: 4>, scalar_prefetch = 0 : i64, scratch_operands = 0 : i64, tpu.core_type = #tpu.core_type<tc>, window_params = [{transform_indices = @transform_0, window_bounds = array<i64: 64, 32>}, {pipeline_mode = #tpu.pipeline_mode<synchronous>, transform_indices = @transform_1, window_bounds = array<i64: 32, 128>}, {pipeline_mode = #tpu.pipeline_mode<synchronous>, transform_indices = @transform_2, window_bounds = array<i64: 1, 128>}, {pipeline_mode = #tpu.pipeline_mode<synchronous>, transform_indices = @transform_3, window_bounds = array<i64: 128, 128>}, {pipeline_mode = #tpu.pipeline_mode<synchronous>, transform_indices = @transform_4, window_bounds = array<i64: 1, 128>}, {transform_indices = @transform_5, window_bounds = array<i64: 64, 128>}]} {
    %c0 = arith.constant 0 : index
    %c0_0 = arith.constant 0 : index
    %0 = vector.load %arg1[%c0, %c0_0] : memref<64x32xbf16, #tpu.memory_space<vmem>>, vector<64x32xbf16>
    %c0_1 = arith.constant 0 : index
    %c0_2 = arith.constant 0 : index
    %1 = vector.load %arg2[%c0_1, %c0_2] : memref<32x128xbf16, #tpu.memory_space<vmem>>, vector<32x128xbf16>
    %cst = arith.constant dense<0.000000e+00> : vector<64x128xf32>
    %2 = tpu.matmul %0, %1, %cst {dimension_numbers = #tpu.dot_dimension_numbers<[1], [0], [0], [1], [0, 0, 1, 1], [], []>} : vector<64x32xbf16>, vector<32x128xbf16>, vector<64x128xf32> -> vector<64x128xf32>
    %c0_3 = arith.constant 0 : index
    %c0_4 = arith.constant 0 : index
    %3 = vector.load %arg3[%c0_3, %c0_4] : memref<1x128xf32, #tpu.memory_space<vmem>>, vector<1x128xf32>
    %4 = vector.broadcast %3 : vector<1x128xf32> to vector<64x128xf32>
    %5 = arith.addf %2, %4 : vector<64x128xf32>
    %cst_5 = arith.constant 0.000000e+00 : f32
    %6 = vector.broadcast %cst_5 : f32 to vector<64x128xf32>
    %7 = arith.maximumf %5, %6 : vector<64x128xf32>
    %8 = arith.truncf %7 : vector<64x128xf32> to vector<64x128xbf16>
    %c0_6 = arith.constant 0 : index
    %c0_7 = arith.constant 0 : index
    %9 = vector.load %arg4[%c0_6, %c0_7] : memref<128x128xbf16, #tpu.memory_space<vmem>>, vector<128x128xbf16>
    %cst_8 = arith.constant dense<0.000000e+00> : vector<64x128xf32>
    %10 = tpu.matmul %8, %9, %cst_8 {dimension_numbers = #tpu.dot_dimension_numbers<[1], [0], [0], [1], [0, 0, 1, 1], [], []>} : vector<64x128xbf16>, vector<128x128xbf16>, vector<64x128xf32> -> vector<64x128xf32>
    %c0_9 = arith.constant 0 : index
    %c0_10 = arith.constant 0 : index
    %11 = vector.load %arg5[%c0_9, %c0_10] : memref<1x128xf32, #tpu.memory_space<vmem>>, vector<1x128xf32>
    %12 = vector.broadcast %11 : vector<1x128xf32> to vector<64x128xf32>
    %13 = arith.addf %10, %12 : vector<64x128xf32>
    %c0_11 = arith.constant 0 : index
    %c0_12 = arith.constant 0 : index
    %14 = vector.load %arg6[%c0_11, %c0_12] : memref<64x128xf32, #tpu.memory_space<vmem>>, vector<64x128xf32>
    tpu.vector_store %arg6[%c0_11, %c0_12], %13 {strides = array<i32>} : memref<64x128xf32, #tpu.memory_space<vmem>>, vector<64x128xf32>,
    return
  }
  func.func @transform_0(%arg0: i32) -> (i32, i32) {
    %c0_i32 = arith.constant 0 : i32
    %c0_i32_0 = arith.constant 0 : i32
    return %arg0, %c0_i32 : i32, i32
  }
  func.func @transform_1(%arg0: i32) -> (i32, i32) {
    %c0_i32 = arith.constant 0 : i32
    %c0_i32_0 = arith.constant 0 : i32
    %c0_i32_1 = arith.constant 0 : i32
    return %c0_i32, %c0_i32_0 : i32, i32
  }
  func.func @transform_2(%arg0: i32) -> (i32, i32) {
    %c0_i32 = arith.constant 0 : i32
    %c0_i32_0 = arith.constant 0 : i32
    %c0_i32_1 = arith.constant 0 : i32
    return %c0_i32, %c0_i32_0 : i32, i32
  }
  func.func @transform_3(%arg0: i32) -> (i32, i32) {
    %c0_i32 = arith.constant 0 : i32
    %c0_i32_0 = arith.constant 0 : i32
    %c0_i32_1 = arith.constant 0 : i32
    return %c0_i32, %c0_i32_0 : i32, i32
  }
  func.func @transform_4(%arg0: i32) -> (i32, i32) {
    %c0_i32 = arith.constant 0 : i32
    %c0_i32_0 = arith.constant 0 : i32
    %c0_i32_1 = arith.constant 0 : i32
    return %c0_i32, %c0_i32_0 : i32, i32
  }
  func.func @transform_5(%arg0: i32) -> (i32, i32) {
    %c0_i32 = arith.constant 0 : i32
    %c0_i32_0 = arith.constant 0 : i32
    return %arg0, %c0_i32 : i32, i32
  }
}

</mosaic_0001>

<llo_original>
// kernel: tpu_custom_call.1
$region0: #{tpu_custom_call.1}
  #allocation0 [shape = 'u32[]', space=smem, size = 0x4, offset = 0x4, fixed_abs, tag = 'smem constant byte address 0x4 - core index']
  #allocation1 [shape = 'u32[144,128]{1,0:T(1,128)}', space=vmem, size = 0x12000, scoped, tag = 'internal scratch']
  %s0 = inlined_call_operand.vmem [shape: bf16[256,32], index: 0, kind: input, shape index: {}]
  %s1 = inlined_call_operand.vmem [shape: bf16[32,128], index: 1, kind: input, shape index: {}]
  %s2 = inlined_call_operand.vmem [shape: f32[1,128], index: 2, kind: input, shape index: {}]
  %s3 = inlined_call_operand.vmem [shape: bf16[128,128], index: 3, kind: input, shape index: {}]
  %s4 = inlined_call_operand.vmem [shape: f32[1,128], index: 4, kind: input, shape index: {}]
  %s5 = inlined_call_operand.hbm [shape: f32[256,128], index: 5, kind: output, shape index: {}]
  %s6 = sld [smem:[#allocation0]]
  $region53: #{tpu_custom_call.1} parent=0
    _
  %s8 = ssub.s32 1, %s6
  %s9 = scalar_select 0, %s8, %s6
  $region1: #{tpu_custom_call.1} parent=0
    #allocation2 [shape = 'u8[65536]{0}', space=vmem, size = 0x10000, scoped, tag = 'output window, operand 0']
    #allocation3 [shape = 's32[2]{0}', space=sflag, size = 0x8, scoped, tag = 'scoped memory for tpu_custom_call.1']
    %10 = vsyncpa [#allocation3], 0
    %s11 = scalar_lea.sflag [#allocation3], 1
    %12 = vsyncpa %s11, 0
    loop: start=0, step=1, limit=6
    $region2: #{tpu_custom_call.1} parent=1 // loop_pre_header
      _
    $region3: #{tpu_custom_call.1} parent=1 // loop_header
      %s14 = sphi 0, %s18
      %p15 = scmp.ge.s32.totalorder %s14, 6
      %s24 = sphi 0, %s26
      %s27 = sphi 0, %s24
      %s28 = sphi 0, %s27
      %s44 = sphi 0, %s28
      %s48 = sphi 0, %s48
      %s50 = sphi 0, %s48
      %s51 = sphi 0, %s50
      %s65 = sphi 0, %s51
      %s69 = sphi 0, %s69
      %s71 = sphi 0, %s69
      %s72 = sphi 0, %s71
      %s86 = sphi 0, %s72
      %s90 = sphi 0, %s90
      %s92 = sphi 0, %s90
      %s93 = sphi 0, %s92
      %s107 = sphi 0, %s93
      %s111 = sphi 0, %s111
      %s113 = sphi 0, %s111
      %s114 = sphi 0, %s113
      %s128 = sphi 0, %s114
      %s134 = sphi 0, %s136
      %s137 = sphi 0, %s134
      %s138 = sphi 0, %s137
      %s154 = sphi 0, %s138
    $region4: #{tpu_custom_call.1} parent=1 // loop_header_branch
      %17 = sbr.rel (%p15) target = $region8
    $region5: #{tpu_custom_call.1} parent=1 // loop_body
      %s19 = ssub.s32 %s14, 1
      %s20 = ssub.s32 %s14, 2
      %s21 = sadd.s32 %s14, 1
      %s22 = ssub.s32 %s14, %s21
      %p23 = scmp.eq.s32.totalorder %s22, 0
      %s25 = sadd.s32 %s24, 1
      %s26 = scalar_select %p23, %s24, %s25
      %p29 = pneg %p23
      %p30 = scmp.eq.s32.totalorder %s14, 3
      %p31 = por %p29, %p30
      %p32 = scmp.ne.s32.totalorder %s24, %s27
      %p33 = scmp.eq.s32.totalorder %s14, 0
      %p34 = por %p32, %p33
      %p35 = scmp.ne.s32.totalorder %s24, %s27
      %p36 = scmp.eq.s32.totalorder %s19, 3
      %p37 = por %p35, %p36
      %p38 = scmp.ne.s32.totalorder %s27, %s28
      %p39 = scmp.eq.s32.totalorder %s19, 0
      %p40 = por %p38, %p39
      %p41 = scmp.ne.s32.totalorder %s27, %s28
      %p42 = scmp.eq.s32.totalorder %s20, 3
      %p43 = por %p41, %p42
      %p45 = scmp.ne.s32.totalorder %s28, %s44
      %p46 = scmp.eq.s32.totalorder %s20, 0
      %p47 = por %p45, %p46
      %s49 = sadd.s32 %s48, 1
      %p52 = scmp.eq.s32.totalorder %s14, 3
      %p53 = scmp.ne.s32.totalorder %s48, %s50
      %p54 = scmp.eq.s32.totalorder %s14, 0
      %p55 = por %p53, %p54
      %p56 = scmp.ne.s32.totalorder %s48, %s50
      %p57 = scmp.eq.s32.totalorder %s19, 3
      %p58 = por %p56, %p57
      %p59 = scmp.ne.s32.totalorder %s50, %s51
      %p60 = scmp.eq.s32.totalorder %s19, 0
      %p61 = por %p59, %p60
      %p62 = scmp.ne.s32.totalorder %s50, %s51
      %p63 = scmp.eq.s32.totalorder %s20, 3
      %p64 = por %p62, %p63
      %p66 = scmp.ne.s32.totalorder %s51, %s65
      %p67 = scmp.eq.s32.totalorder %s20, 0
      %p68 = por %p66, %p67
      %s70 = sadd.s32 %s69, 1
      %p73 = scmp.eq.s32.totalorder %s14, 3
      %p74 = scmp.ne.s32.totalorder %s69, %s71
      %p75 = scmp.eq.s32.totalorder %s14, 0
      %p76 = por %p74, %p75
      %p77 = scmp.ne.s32.totalorder %s69, %s71
      %p78 = scmp.eq.s32.totalorder %s19, 3
      %p79 = por %p77, %p78
      %p80 = scmp.ne.s32.totalorder %s71, %s72
      %p81 = scmp.eq.s32.totalorder %s19, 0
      %p82 = por %p80, %p81
      %p83 = scmp.ne.s32.totalorder %s71, %s72
      %p84 = scmp.eq.s32.totalorder %s20, 3
      %p85 = por %p83, %p84
      %p87 = scmp.ne.s32.totalorder %s72, %s86
      %p88 = scmp.eq.s32.totalorder %s20, 0
      %p89 = por %p87, %p88
      %s91 = sadd.s32 %s90, 1
      %p94 = scmp.eq.s32.totalorder %s14, 3
      %p95 = scmp.ne.s32.totalorder %s90, %s92
      %p96 = scmp.eq.s32.totalorder %s14, 0
      %p97 = por %p95, %p96
      %p98 = scmp.ne.s32.totalorder %s90, %s92
      %p99 = scmp.eq.s32.totalorder %s19, 3
      %p100 = por %p98, %p99
      %p101 = scmp.ne.s32.totalorder %s92, %s93
      %p102 = scmp.eq.s32.totalorder %s19, 0
      %p103 = por %p101, %p102
      %p104 = scmp.ne.s32.totalorder %s92, %s93
      %p105 = scmp.eq.s32.totalorder %s20, 3
      %p106 = por %p104, %p105
      %p108 = scmp.ne.s32.totalorder %s93, %s107
      %p109 = scmp.eq.s32.totalorder %s20, 0
      %p110 = por %p108, %p109
      %s112 = sadd.s32 %s111, 1
      %p115 = scmp.eq.s32.totalorder %s14, 3
      %p116 = scmp.ne.s32.totalorder %s111, %s113
      %p117 = scmp.eq.s32.totalorder %s14, 0
      %p118 = por %p116, %p117
      %p119 = scmp.ne.s32.totalorder %s111, %s113
      %p120 = scmp.eq.s32.totalorder %s19, 3
      %p121 = por %p119, %p120
      %p122 = scmp.ne.s32.totalorder %s113, %s114
      %p123 = scmp.eq.s32.totalorder %s19, 0
      %p124 = por %p122, %p123
      %p125 = scmp.ne.s32.totalorder %s113, %s114
      %p126 = scmp.eq.s32.totalorder %s20, 3
      %p127 = por %p125, %p126
      %p129 = scmp.ne.s32.totalorder %s114, %s128
      %p130 = scmp.eq.s32.totalorder %s20, 0
      %p131 = por %p129, %p130
      %s132 = ssub.s32 %s14, %s21
      %p133 = scmp.eq.s32.totalorder %s132, 0
      %s135 = sadd.s32 %s134, 1
      %s136 = scalar_select %p133, %s134, %s135
      %p139 = pneg %p133
      %p140 = scmp.eq.s32.totalorder %s14, 3
      %p141 = por %p139, %p140
      %p142 = scmp.ne.s32.totalorder %s134, %s137
      %p143 = scmp.eq.s32.totalorder %s14, 0
      %p144 = por %p142, %p143
      %p145 = scmp.ne.s32.totalorder %s134, %s137
      %p146 = scmp.eq.s32.totalorder %s19, 3
      %p147 = por %p145, %p146
      %p148 = scmp.ne.s32.totalorder %s137, %s138
      %p149 = scmp.eq.s32.totalorder %s19, 0
      %p150 = por %p148, %p149
      %p151 = scmp.ne.s32.totalorder %s137, %s138
      %p152 = scmp.eq.s32.totalorder %s20, 3
      %p153 = por %p151, %p152
      %p155 = scmp.ne.s32.totalorder %s138, %s154
      %p156 = scmp.eq.s32.totalorder %s20, 0
      %p157 = por %p155, %p156
      %p158 = scmp.le.s32.totalorder 1, %s14
      %p159 = scmp.lt.s32.totalorder %s14, 5
      %p160 = pnand %p158, %p159
      %p161 = pneg %p160
      // Predicated region
      $region9: #{tpu_custom_call.1} parent=5 // pred_check
        _
      $region10: #{tpu_custom_call.1} parent=5 // pred_check_branch
        %163 = sbr.rel (%p160) target = $region12
      $region11: #{tpu_custom_call.1} parent=5 // pred_region
        %s164 = ssub.s32 %s14, 1
        // Predicated region
        $region13: #{tpu_custom_call.1} parent=11 // pred_check
          %p165 = pneg %p61
        $region14: #{tpu_custom_call.1} parent=11 // pred_check_branch
          %167 = sbr.rel (%p165) target = $region16
        $region15: #{tpu_custom_call.1} parent=11 // pred_region
          _
        $region16: #{tpu_custom_call.1} parent=11 // pred_fallthru
          _
        // Predicated region
        $region17: #{tpu_custom_call.1} parent=11 // pred_check
          %p168 = pneg %p82
        $region18: #{tpu_custom_call.1} parent=11 // pred_check_branch
          %170 = sbr.rel (%p168) target = $region20
        $region19: #{tpu_custom_call.1} parent=11 // pred_region
          _
        $region20: #{tpu_custom_call.1} parent=11 // pred_fallthru
          _
        // Predicated region
        $region21: #{tpu_custom_call.1} parent=11 // pred_check
          %p171 = pneg %p103
        $region22: #{tpu_custom_call.1} parent=11 // pred_check_branch
          %173 = sbr.rel (%p171) target = $region24
        $region23: #{tpu_custom_call.1} parent=11 // pred_region
          _
        $region24: #{tpu_custom_call.1} parent=11 // pred_fallthru
          _
        // Predicated region
        $region25: #{tpu_custom_call.1} parent=11 // pred_check
          %p174 = pneg %p124
        $region26: #{tpu_custom_call.1} parent=11 // pred_check_branch
          %176 = sbr.rel (%p174) target = $region28
        $region27: #{tpu_custom_call.1} parent=11 // pred_region
          _
        $region28: #{tpu_custom_call.1} parent=11 // pred_fallthru
          _
      $region12: #{tpu_custom_call.1} parent=5 // pred_fallthru
        _
      %p177 = scmp.lt.s32.totalorder %s14, 4
      // Predicated region
      $region29: #{tpu_custom_call.1} parent=5 // pred_check
        %p178 = pneg %p177
      $region30: #{tpu_custom_call.1} parent=5 // pred_check_branch
        %180 = sbr.rel (%p178) target = $region32
      $region31: #{tpu_custom_call.1} parent=5 // pred_region
        // Predicated region
        $region33: #{tpu_custom_call.1} parent=31 // pred_check
          %p181 = pneg %p34
        $region34: #{tpu_custom_call.1} parent=31 // pred_check_branch
          %183 = sbr.rel (%p181) target = $region36
        $region35: #{tpu_custom_call.1} parent=31 // pred_region
          %s184 = smul.u32 8, %s14
          %p185 = scmp.lt.s32.totalorder %s184, 31
          %s186 = scalar_select %p185, %s184, 31
          %s187 = smul.addr %s186, 4
          %s188 = scalar_lea.vmem %s0, %s187
          %s189 = smul.u32 8, %s14
        $region36: #{tpu_custom_call.1} parent=31 // pred_fallthru
          _
      $region32: #{tpu_custom_call.1} parent=5 // pred_fallthru
        _
      %p190 = scmp.le.s32.totalorder 1, %s14
      %p191 = scmp.lt.s32.totalorder %s14, 5
      %p192 = pnand %p190, %p191
      %p193 = pneg %p192
      // Predicated region
      $region37: #{tpu_custom_call.1} parent=5 // pred_check
        _
      $region38: #{tpu_custom_call.1} parent=5 // pred_check_branch
        %195 = sbr.rel (%p192) target = $region40
      $region39: #{tpu_custom_call.1} parent=5 // pred_region
        %s196 = ssub.s32 %s14, 1
        %s197 = smul.u32 8, %s19
        %p198 = scmp.lt.s32.totalorder %s197, 31
        %s199 = scalar_select %p198, %s197, 31
        %s200 = smul.addr %s199, 4
        %s201 = scalar_lea.vmem %s0, %s200
        %p202 = pneg %p40
        %p203 = pneg %p37
        %p204 = pneg %p61
        %p205 = pneg %p58
        %p206 = pneg %p82
        %p207 = pneg %p79
        %p208 = pneg %p103
        %p209 = pneg %p100
        %p210 = pneg %p124
        %p211 = pneg %p121
        %p212 = pneg %p150
        %p213 = pneg %p147
        %s214 = sand.u32 %s137, 1
        %s215 = scalar_lea.sflag [#allocation3], %s214
        %s216 = sand.u32 %s137, 1
        %s217 = smul.addr %s216, 64
        %s218 = scalar_lea.vmem [#allocation2], %s217
        %s219 = smul.u32 8, %s19
        %p220 = scmp.lt.s32.totalorder %s219, 31
        %s221 = scalar_select %p220, %s219, 31
        %s222 = smul.addr %s221, 4
        %s223 = scalar_lea.vmem %s0, %s222
        %s224 = smul.u32 8, %s19
        %s225 = smul.u32 8, %s19
        %v227 = vld [vmem:[%s223] sm:$0xf]
        %v228 = vld [vmem:[%s223 + $0x4] sm:$0xf]
        %v229 = vld [vmem:[%s223 + $0x8] sm:$0xf]
        %v230 = vld [vmem:[%s223 + $0xc] sm:$0xf]
        %v231 = vld [vmem:[%s223 + $0x10] sm:$0xf]
        %v232 = vld [vmem:[%s223 + $0x14] sm:$0xf]
        %v233 = vld [vmem:[%s223 + $0x18] sm:$0xf]
        %v234 = vld [vmem:[%s223 + $0x1c] sm:$0xf]
        %v235 = vld [vmem:[%s1] sm:$0xf]
        %v236 = vld [vmem:[%s1 + $0x4] sm:$0xf]
        %v237 = vld [vmem:[%s1 + $0x8] sm:$0xf]
        %v238 = vld [vmem:[%s1 + $0xc] sm:$0xf]
        %v239 = vld [vmem:[%s2] sm:$0x1]
        %v241 = vlaneseq
        %v242 = vshrl.u32 %v241, 7
        %v243 = vsub.s32 0, %v242
        %v244 = vrot.slane %v239, %v243
        %v254 = vunpack.c.l.b16 %v227
        %v255 = vunpack.c.l.b16 %v228
        %v256 = vunpack.c.l.b16 %v229
        %v257 = vunpack.c.l.b16 %v230
        %v258 = vunpack.c.l.b16 %v231
        %v259 = vunpack.c.l.b16 %v232
        %v260 = vunpack.c.l.b16 %v233
        %v261 = vunpack.c.l.b16 %v234
        %v262 = vpack.c.b16 %v255, %v254
        %v263 = vpack.c.b16 %v257, %v256
        %v264 = vpack.c.b16 %v259, %v258
        %v265 = vpack.c.b16 %v261, %v260
        %v270 = vunpack.c.l.b16 %v235
        %v271 = vunpack.c.l.b16 %v236
        %v272 = vunpack.c.l.b16 %v237
        %v273 = vunpack.c.l.b16 %v238
        %v274 = vpack.c.b16 %v271, %v270
        %v275 = vpack.c.b16 %v273, %v272
        %vm278 = vcmask 261120
        %v280 = vsel %vm278, %v262, 0
        %v283 = vsel %vm278, %v263, 0
        %v286 = vsel %vm278, %v264, 0
        %v289 = vsel %vm278, %v265, 0
        %291 = vmatprep.subr.bf16.mxu0 0
        %292 = vmatpush1.bf16.msra.mxu0 0
        %293 = vmatprep.subr.bf16.mxu0 0
        %294 = vmatpush1.bf16.msra.mxu0 0
        %295 = vmatprep.subr.bf16.mxu0 0
        %296 = vmatpush1.bf16.msra.mxu0 0
        %297 = vmatprep.subr.bf16.mxu0 0
        %298 = vmatpush1.bf16.msra.mxu0 0
        %299 = vmatprep.subr.bf16.mxu0 0
        %300 = vmatpush1.bf16.msra.mxu0 0
        %301 = vmatprep.subr.bf16.mxu0 0
        %302 = vmatpush1.bf16.msra.mxu0 0
        %303 = vmatprep.subr.bf16.mxu0 0
        %304 = vmatpush1.bf16.msra.mxu0 %v275
        %305 = vmatprep.subr.bf16.mxu0 0
        %306 = vmatpush1.bf16.msra.mxu0 %v274
        %307 = vmatprep.subr.bf16.mxu0 0
        %308 = vmatpush2.bf16.msra.mxu0 0
        %309 = vmatprep.subr.bf16.mxu0 0
        %310 = vmatpush2.bf16.msra.mxu0 0
        %311 = vmatprep.subr.bf16.mxu0 0
        %312 = vmatpush2.bf16.msra.mxu0 0
        %313 = vmatprep.subr.bf16.mxu0 0
        %314 = vmatpush2.bf16.msra.mxu0 0
        %315 = vmatprep.subr.bf16.mxu0 0
        %316 = vmatpush2.bf16.msra.mxu0 0
        %317 = vmatprep.subr.bf16.mxu0 0
        %318 = vmatpush2.bf16.msra.mxu0 0
        %319 = vmatprep.subr.bf16.mxu0 0
        %320 = vmatpush2.bf16.msra.mxu0 0
        %321 = vmatprep.subr.bf16.mxu0 0
        %322 = vmatpush2.bf16.msra.mxu0 0
        %323 = vmatprep.mubr.bf16.mxu0 0
        %324 = vmatmul.mubr.bf16.gmra.mxu0 %v280
        %v325 = vpop.f32.mrf.mxu0
        %v326 = vadd.f32 %v244, %v325
        %v327 = vpop.f32.mrf.mxu0
        %v328 = vpop.f32.mrf.mxu0
        %v329 = vadd.f32 %v244, %v328
        %v330 = vpop.f32.mrf.mxu0
        %331 = vmatprep.mubr.bf16.mxu0 0
        %332 = vmatmul.mubr.bf16.gmra.mxu0 %v283
        %v333 = vpop.f32.mrf.mxu0
        %v334 = vadd.f32 %v244, %v333
        %v335 = vpop.f32.mrf.mxu0
        %v336 = vpop.f32.mrf.mxu0
        %v337 = vadd.f32 %v244, %v336
        %v338 = vpop.f32.mrf.mxu0
        %339 = vmatprep.mubr.bf16.mxu0 0
        %340 = vmatmul.mubr.bf16.gmra.mxu0 %v286
        %v341 = vpop.f32.mrf.mxu0
        %v342 = vadd.f32 %v244, %v341
        %v343 = vpop.f32.mrf.mxu0
        %v344 = vpop.f32.mrf.mxu0
        %v345 = vadd.f32 %v244, %v344
        %v346 = vpop.f32.mrf.mxu0
        %347 = vmatprep.mubr.bf16.mxu0 0
        %348 = vmatmul.mubr.bf16.gmra.mxu0 %v289
        %v349 = vpop.f32.mrf.mxu0
        %v350 = vadd.f32 %v244, %v349
        %v351 = vpop.f32.mrf.mxu0
        %v352 = vpop.f32.mrf.mxu0
        %v353 = vadd.f32 %v244, %v352
        %v354 = vpop.f32.mrf.mxu0
        %355 = vdwg.mxu0
        %v356 = vmax.f32 %v326, 0.0
        %v357 = vmax.f32 %v329, 0.0
        %v358 = vmax.f32 %v334, 0.0
        %v359 = vmax.f32 %v337, 0.0
        %v360 = vmax.f32 %v342, 0.0
        %v361 = vmax.f32 %v345, 0.0
        %v362 = vmax.f32 %v350, 0.0
        %v363 = vmax.f32 %v353, 0.0
        %v364 = vpack.c.bf16 %v357, %v356
        %v365 = vpack.c.bf16 %v359, %v358
        %v366 = vpack.c.bf16 %v361, %v360
        %v367 = vpack.c.bf16 %v363, %v362
        %v368 = vld [vmem:[%s3] sm:$0xf]
        %v369 = vld [vmem:[%s3 + $0x4] sm:$0xf]
        %v370 = vld [vmem:[%s3 + $0x8] sm:$0xf]
        %v371 = vld [vmem:[%s3 + $0xc] sm:$0xf]
        %v372 = vld [vmem:[%s3 + $0x10] sm:$0xf]
        %v373 = vld [vmem:[%s3 + $0x14] sm:$0xf]
        %v374 = vld [vmem:[%s3 + $0x18] sm:$0xf]
        %v375 = vld [vmem:[%s3 + $0x1c] sm:$0xf]
        %v376 = vld [vmem:[%s3 + $0x20] sm:$0xf]
        %v377 = vld [vmem:[%s3 + $0x24] sm:$0xf]
        %v378 = vld [vmem:[%s3 + $0x28] sm:$0xf]
        %v379 = vld [vmem:[%s3 + $0x2c] sm:$0xf]
        %v380 = vld [vmem:[%s3 + $0x30] sm:$0xf]
        %v381 = vld [vmem:[%s3 + $0x34] sm:$0xf]
        %v382 = vld [vmem:[%s3 + $0x38] sm:$0xf]
        %v383 = vld [vmem:[%s3 + $0x3c] sm:$0xf]
        %v384 = vld [vmem:[%s4] sm:$0x1]
        %v386 = vlaneseq
        %v387 = vshrl.u32 %v386, 7
        %v388 = vsub.s32 0, %v387
        %v389 = vrot.slane %v384, %v388
        %v407 = vunpack.c.l.b16 %v368
        %v408 = vunpack.c.l.b16 %v369
        %v409 = vunpack.c.l.b16 %v370
        %v410 = vunpack.c.l.b16 %v371
        %v411 = vunpack.c.l.b16 %v372
        %v412 = vunpack.c.l.b16 %v373
        %v413 = vunpack.c.l.b16 %v374
        %v414 = vunpack.c.l.b16 %v375
        %v415 = vunpack.c.l.b16 %v376
        %v416 = vunpack.c.l.b16 %v377
        %v417 = vunpack.c.l.b16 %v378
        %v418 = vunpack.c.l.b16 %v379
        %v419 = vunpack.c.l.b16 %v380
        %v420 = vunpack.c.l.b16 %v381
        %v421 = vunpack.c.l.b16 %v382
        %v422 = vunpack.c.l.b16 %v383
        %v423 = vpack.c.b16 %v408, %v407
        %v424 = vpack.c.b16 %v410, %v409
        %v425 = vpack.c.b16 %v412, %v411
        %v426 = vpack.c.b16 %v414, %v413
        %v427 = vpack.c.b16 %v416, %v415
        %v428 = vpack.c.b16 %v418, %v417
        %v429 = vpack.c.b16 %v420, %v419
        %v430 = vpack.c.b16 %v422, %v421
        %439 = vmatprep.subr.bf16.mxu0 0
        %440 = vmatpush1.bf16.msra.mxu0 %v430
        %441 = vmatprep.subr.bf16.mxu0 0
        %442 = vmatpush1.bf16.msra.mxu0 %v429
        %443 = vmatprep.subr.bf16.mxu0 0
        %444 = vmatpush1.bf16.msra.mxu0 %v428
        %445 = vmatprep.subr.bf16.mxu0 0
        %446 = vmatpush1.bf16.msra.mxu0 %v427
        %447 = vmatprep.subr.bf16.mxu0 0
        %448 = vmatpush1.bf16.msra.mxu0 %v426
        %449 = vmatprep.subr.bf16.mxu0 0
        %450 = vmatpush1.bf16.msra.mxu0 %v425
        %451 = vmatprep.subr.bf16.mxu0 0
        %452 = vmatpush1.bf16.msra.mxu0 %v424
        %453 = vmatprep.subr.bf16.mxu0 0
        %454 = vmatpush1.bf16.msra.mxu0 %v423
        %455 = vmatprep.subr.bf16.mxu0 0
        %456 = vmatpush2.bf16.msra.mxu0 0
        %457 = vmatprep.subr.bf16.mxu0 0
        %458 = vmatpush2.bf16.msra.mxu0 0
        %459 = vmatprep.subr.bf16.mxu0 0
        %460 = vmatpush2.bf16.msra.mxu0 0
        %461 = vmatprep.subr.bf16.mxu0 0
        %462 = vmatpush2.bf16.msra.mxu0 0
        %463 = vmatprep.subr.bf16.mxu0 0
        %464 = vmatpush2.bf16.msra.mxu0 0
        %465 = vmatprep.subr.bf16.mxu0 0
        %466 = vmatpush2.bf16.msra.mxu0 0
        %467 = vmatprep.subr.bf16.mxu0 0
        %468 = vmatpush2.bf16.msra.mxu0 0
        %469 = vmatprep.subr.bf16.mxu0 0
        %470 = vmatpush2.bf16.msra.mxu0 0
        %471 = vmatprep.mubr.bf16.mxu0 0
        %472 = vmatmul.mubr.bf16.gmra.mxu0 %v364
        %v473 = vpop.f32.mrf.mxu0
        %v474 = vadd.f32 %v389, %v473
        %v475 = vpop.f32.mrf.mxu0
        %v476 = vpop.f32.mrf.mxu0
        %v477 = vadd.f32 %v389, %v476
        %v478 = vpop.f32.mrf.mxu0
        %479 = vmatprep.mubr.bf16.mxu0 0
        %480 = vmatmul.mubr.bf16.gmra.mxu0 %v365
        %v481 = vpop.f32.mrf.mxu0
        %v482 = vadd.f32 %v389, %v481
        %v483 = vpop.f32.mrf.mxu0
        %v484 = vpop.f32.mrf.mxu0
        %v485 = vadd.f32 %v389, %v484
        %v486 = vpop.f32.mrf.mxu0
        %487 = vmatprep.mubr.bf16.mxu0 0
        %488 = vmatmul.mubr.bf16.gmra.mxu0 %v366
        %v489 = vpop.f32.mrf.mxu0
        %v490 = vadd.f32 %v389, %v489
        %v491 = vpop.f32.mrf.mxu0
        %v492 = vpop.f32.mrf.mxu0
        %v493 = vadd.f32 %v389, %v492
        %v494 = vpop.f32.mrf.mxu0
        %495 = vmatprep.mubr.bf16.mxu0 0
        %496 = vmatmul.mubr.bf16.gmra.mxu0 %v367
        %v497 = vpop.f32.mrf.mxu0
        %v498 = vadd.f32 %v389, %v497
        %v499 = vpop.f32.mrf.mxu0
        %v500 = vpop.f32.mrf.mxu0
        %v501 = vadd.f32 %v389, %v500
        %v502 = vpop.f32.mrf.mxu0
        %503 = vdwg.mxu0
        %504 = vst [vmem:[%s218] sm:$0xff] %v474
        %505 = vst [vmem:[%s218 + $0x8] sm:$0xff] %v477
        %506 = vst [vmem:[%s218 + $0x10] sm:$0xff] %v482
        %507 = vst [vmem:[%s218 + $0x18] sm:$0xff] %v485
        %508 = vst [vmem:[%s218 + $0x20] sm:$0xff] %v490
        %509 = vst [vmem:[%s218 + $0x28] sm:$0xff] %v493
        %510 = vst [vmem:[%s218 + $0x30] sm:$0xff] %v498
        %511 = vst [vmem:[%s218 + $0x38] sm:$0xff] %v501
        %s512 = sand.u32 %s137, 1
        %s513 = scalar_lea.sflag [#allocation3], %s512
        %s514 = sand.u32 %s137, 1
        %s515 = smul.addr %s514, 64
        %s516 = scalar_lea.vmem [#allocation2], %s515
        // Predicated region
        $region41: #{tpu_custom_call.1} parent=39 // pred_check
          %p517 = pneg %p147
        $region42: #{tpu_custom_call.1} parent=39 // pred_check_branch
          %519 = sbr.rel (%p517) target = $region44
        $region43: #{tpu_custom_call.1} parent=39 // pred_region
          %s520 = smul.u32 8, %s19
          %s522 = ssub.s32 1024, 1024
          %523 = vsyncadd %s513, %s522
          %s524 = smul.addr %s520, 128
          %s525 = scalar_lea.hbm %s5, %s524
          %s526 = sshll.u32 %s516, 4
          %s527 = int_to_ptr.vmem [resolvable:$true] %s526
          %532 = dma.vmem_to_hbm [thread:$0]  %s527, 1024, %s525, %s513, 128, 128, 8
        $region44: #{tpu_custom_call.1} parent=39 // pred_fallthru
          _
      $region40: #{tpu_custom_call.1} parent=5 // pred_fallthru
        _
      %p533 = scmp.le.s32.totalorder 2, %s14
      // Predicated region
      $region45: #{tpu_custom_call.1} parent=5 // pred_check
        %p534 = pneg %p533
      $region46: #{tpu_custom_call.1} parent=5 // pred_check_branch
        %536 = sbr.rel (%p534) target = $region48
      $region47: #{tpu_custom_call.1} parent=5 // pred_region
        %s537 = ssub.s32 %s14, 2
        // Predicated region
        $region49: #{tpu_custom_call.1} parent=47 // pred_check
          %p538 = pneg %p153
        $region50: #{tpu_custom_call.1} parent=47 // pred_check_branch
          %540 = sbr.rel (%p538) target = $region52
        $region51: #{tpu_custom_call.1} parent=47 // pred_region
          %s541 = sand.u32 %s138, 1
          %s542 = scalar_lea.sflag [#allocation3], %s541
          %s543 = sand.u32 %s138, 1
          %s544 = smul.addr %s543, 64
          %s545 = scalar_lea.vmem [#allocation2], %s544
          %546 = dma.done %s542, 1024
        $region52: #{tpu_custom_call.1} parent=47 // pred_fallthru
          _
      $region48: #{tpu_custom_call.1} parent=5 // pred_fallthru
        _
    $region6: #{tpu_custom_call.1} parent=1 // loop_footer
      %s18 = sadd.s32 1, %s14
    $region7: #{tpu_custom_call.1} parent=1 // loop_footer_branch
      %13 = sbr.rel target = $region3
    $region8: #{tpu_custom_call.1} parent=1 // loop_exit
      _
    %547 = vsyncpa [#allocation3], 1
    %s548 = scalar_lea.sflag [#allocation3], 1
    %549 = vsyncpa %s548, 1

</llo_original>
